<compile_context>
chip_gen: v6e
topology: v6e:2x2x1
jax: 0.10.0
libtpu: 0.0.40
codegen_flags: <defaults>
</compile_context>

<pallas_src>
import jax
import jax.numpy as jnp
from jax.experimental import pallas as pl
from jax.experimental.pallas import tpu as pltpu


def linear_kernel(x_ref, p_ref, o_ref):
    # x_ref: (B, IN) f32 in VMEM.
    # p_ref: (IN*OUT + OUT,) f32 in SMEM: [w_t.flatten(), b].
    # o_ref: (B, OUT) f32 in VMEM.
    x = x_ref[...].astype(jnp.float32)           # (B, IN): one vreg at this size
    B, in_features = x_ref.shape
    out_features = o_ref.shape[1]

    # Per-output-column scalar-broadcast multiply-adds on the VPU
    # (static, fully unrolled: OUT=2, IN=4).
    cols = []
    for j in range(out_features):
        acc = x[:, 0:1] * p_ref[j]                               # w[0, j]
        for k in range(1, in_features):
            acc = acc + x[:, k:k + 1] * p_ref[k * out_features + j]
        acc = acc + p_ref[in_features * out_features + j]        # bias[j]
        cols.append(acc)                                         # (B, 1)

    # Assemble the full (B, OUT) block and issue ONE store (no per-column
    # masked stores).  Selects over a lane iota avoid any XLU shuffle.
    col_id = jax.lax.broadcasted_iota(jnp.int32, (B, out_features), dimension=1)
    y = jnp.broadcast_to(cols[0], (B, out_features))
    for j in range(1, out_features):
        y = jnp.where(col_id == j, jnp.broadcast_to(cols[j], (B, out_features)), y)

    o_ref[...] = y.astype(o_ref.dtype)


def linear_pallas(x, w_t, b):
    """y = x @ w_t + b in a single, grid-less Pallas invocation.

    x:   (B, IN)   float32 -> VMEM
    w_t: (IN, OUT) float32 (pre-transposed torch weight)
    b:   (OUT,)    float32
    Weight and bias are packed into a single flat f32 SMEM operand.
    """
    B, _ = x.shape
    OUT = w_t.shape[1]
    params = jnp.concatenate(
        [w_t.reshape(-1), b.reshape(-1)]
    ).astype(jnp.float32)                                   # (IN*OUT + OUT,)

    return pl.pallas_call(
        linear_kernel,
        out_shape=jax.ShapeDtypeStruct((B, OUT), x.dtype),
        in_specs=[
            pl.BlockSpec(memory_space=pltpu.MemorySpace.VMEM),   # x
            pl.BlockSpec(memory_space=pltpu.MemorySpace.SMEM),   # packed params
        ],
        out_specs=pl.BlockSpec(memory_space=pltpu.MemorySpace.VMEM),
    )(x, params)


if __name__ == "__main__":
    key = jax.random.PRNGKey(0)
    k_x, k_w, k_b = jax.random.split(key, 3)

    IN_FEATURES, OUT_FEATURES = 4, 2
    BATCH = 8  # multiple of the f32 sublane count

    # Deterministic "parameters" mimicking torch.nn.Linear(4, 2) init:
    # torch weight is (2, 4), bias (2,); we store the weight transposed (4, 2).
    bound = 1.0 / (IN_FEATURES ** 0.5)
    w_t = jax.random.uniform(
        k_w, (IN_FEATURES, OUT_FEATURES), jnp.float32, -bound, bound
    )
    b = jax.random.uniform(k_b, (OUT_FEATURES,), jnp.float32, -bound, bound)

    x = jax.random.normal(k_x, (BATCH, IN_FEATURES), jnp.float32)

    y = linear_pallas(x, w_t, b)
    jax.block_until_ready(y)

    # Correctness check against plain JAX reference.
    y_ref = x @ w_t + b
    assert y.shape == (BATCH, OUT_FEATURES)
    assert jnp.allclose(y, y_ref, atol=1e-5, rtol=1e-5)

    print("KERNEL_OK")
</pallas_src>

<mosaic_0001>
module attributes {stable_mosaic.version = 11 : i64} {
  func.func @linear_kernel(%arg0: memref<8x4xf32, #tpu.memory_space<vmem>>, %arg1: memref<10xf32, #tpu.memory_space<smem>>, %arg2: memref<8x2xf32, #tpu.memory_space<vmem>>) attributes {dimension_semantics = [], scalar_prefetch = 0 : i64, scratch_operands = 0 : i64, tpu.core_type = #tpu.core_type<tc>} {
    %c0 = arith.constant 0 : index
    %c0_0 = arith.constant 0 : index
    %0 = vector.load %arg0[%c0, %c0_0] : memref<8x4xf32, #tpu.memory_space<vmem>>, vector<8x4xf32>
    %1 = vector.extract_strided_slice %0 {offsets = [0, 0], sizes = [8, 1], strides = [1, 1]} : vector<8x4xf32> to vector<8x1xf32>
    %c0_1 = arith.constant 0 : index
    %2 = memref.load %arg1[%c0_1] : memref<10xf32, #tpu.memory_space<smem>>
    %3 = vector.broadcast %2 : f32 to vector<8x1xf32>
    %4 = arith.mulf %1, %3 : vector<8x1xf32>
    %5 = vector.extract_strided_slice %0 {offsets = [0, 1], sizes = [8, 1], strides = [1, 1]} : vector<8x4xf32> to vector<8x1xf32>
    %c2 = arith.constant 2 : index
    %6 = memref.load %arg1[%c2] : memref<10xf32, #tpu.memory_space<smem>>
    %7 = vector.broadcast %6 : f32 to vector<8x1xf32>
    %8 = arith.mulf %5, %7 : vector<8x1xf32>
    %9 = arith.addf %4, %8 : vector<8x1xf32>
    %10 = vector.extract_strided_slice %0 {offsets = [0, 2], sizes = [8, 1], strides = [1, 1]} : vector<8x4xf32> to vector<8x1xf32>
    %c4 = arith.constant 4 : index
    %11 = memref.load %arg1[%c4] : memref<10xf32, #tpu.memory_space<smem>>
    %12 = vector.broadcast %11 : f32 to vector<8x1xf32>
    %13 = arith.mulf %10, %12 : vector<8x1xf32>
    %14 = arith.addf %9, %13 : vector<8x1xf32>
    %15 = vector.extract_strided_slice %0 {offsets = [0, 3], sizes = [8, 1], strides = [1, 1]} : vector<8x4xf32> to vector<8x1xf32>
    %c6 = arith.constant 6 : index
    %16 = memref.load %arg1[%c6] : memref<10xf32, #tpu.memory_space<smem>>
    %17 = vector.broadcast %16 : f32 to vector<8x1xf32>
    %18 = arith.mulf %15, %17 : vector<8x1xf32>
    %19 = arith.addf %14, %18 : vector<8x1xf32>
    %c8 = arith.constant 8 : index
    %20 = memref.load %arg1[%c8] : memref<10xf32, #tpu.memory_space<smem>>
    %21 = vector.broadcast %20 : f32 to vector<8x1xf32>
    %22 = arith.addf %19, %21 : vector<8x1xf32>
    %23 = vector.extract_strided_slice %0 {offsets = [0, 0], sizes = [8, 1], strides = [1, 1]} : vector<8x4xf32> to vector<8x1xf32>
    %c1 = arith.constant 1 : index
    %24 = memref.load %arg1[%c1] : memref<10xf32, #tpu.memory_space<smem>>
    %25 = vector.broadcast %24 : f32 to vector<8x1xf32>
    %26 = arith.mulf %23, %25 : vector<8x1xf32>
    %27 = vector.extract_strided_slice %0 {offsets = [0, 1], sizes = [8, 1], strides = [1, 1]} : vector<8x4xf32> to vector<8x1xf32>
    %c3 = arith.constant 3 : index
    %28 = memref.load %arg1[%c3] : memref<10xf32, #tpu.memory_space<smem>>
    %29 = vector.broadcast %28 : f32 to vector<8x1xf32>
    %30 = arith.mulf %27, %29 : vector<8x1xf32>
    %31 = arith.addf %26, %30 : vector<8x1xf32>
    %32 = vector.extract_strided_slice %0 {offsets = [0, 2], sizes = [8, 1], strides = [1, 1]} : vector<8x4xf32> to vector<8x1xf32>
    %c5 = arith.constant 5 : index
    %33 = memref.load %arg1[%c5] : memref<10xf32, #tpu.memory_space<smem>>
    %34 = vector.broadcast %33 : f32 to vector<8x1xf32>
    %35 = arith.mulf %32, %34 : vector<8x1xf32>
    %36 = arith.addf %31, %35 : vector<8x1xf32>
    %37 = vector.extract_strided_slice %0 {offsets = [0, 3], sizes = [8, 1], strides = [1, 1]} : vector<8x4xf32> to vector<8x1xf32>
    %c7 = arith.constant 7 : index
    %38 = memref.load %arg1[%c7] : memref<10xf32, #tpu.memory_space<smem>>
    %39 = vector.broadcast %38 : f32 to vector<8x1xf32>
    %40 = arith.mulf %37, %39 : vector<8x1xf32>
    %41 = arith.addf %36, %40 : vector<8x1xf32>
    %c9 = arith.constant 9 : index
    %42 = memref.load %arg1[%c9] : memref<10xf32, #tpu.memory_space<smem>>
    %43 = vector.broadcast %42 : f32 to vector<8x1xf32>
    %44 = arith.addf %41, %43 : vector<8x1xf32>
    %45 = tpu.iota {dimensions = array<i32: 1>} : vector<8x2xi32>
    %46 = vector.shape_cast %22 : vector<8x1xf32> to vector<8x1xf32>
    %47 = vector.broadcast %46 : vector<8x1xf32> to vector<8x2xf32>
    %c1_i32 = arith.constant 1 : i32
    %48 = vector.broadcast %c1_i32 : i32 to vector<8x2xi32>
    %49 = arith.cmpi eq, %45, %48 : vector<8x2xi32>
    %50 = vector.shape_cast %44 : vector<8x1xf32> to vector<8x1xf32>
    %51 = vector.broadcast %50 : vector<8x1xf32> to vector<8x2xf32>
    %52 = arith.select %49, %51, %47 : vector<8x2xi1>, vector<8x2xf32>
    %c0_2 = arith.constant 0 : index
    %c0_3 = arith.constant 0 : index
    %53 = vector.load %arg2[%c0_2, %c0_3] : memref<8x2xf32, #tpu.memory_space<vmem>>, vector<8x2xf32>
    tpu.vector_store %arg2[%c0_2, %c0_3], %52 {strides = array<i32>} : memref<8x2xf32, #tpu.memory_space<vmem>>, vector<8x2xf32>,
    return
  }
}

</mosaic_0001>

<llo_original>
// kernel: tpu_custom_call.1
$region0: #{tpu_custom_call.1}
  #allocation0 [shape = 'u32[]', space=smem, size = 0x4, offset = 0x4, fixed_abs, tag = 'smem constant byte address 0x4 - core index']
  #allocation1 [shape = 'u32[144,128]{1,0:T(1,128)}', space=vmem, size = 0x12000, scoped, tag = 'internal scratch']
  %s0 = inlined_call_operand.vmem [shape: f32[8,4], index: 0, kind: input, shape index: {}]
  %s1 = inlined_call_operand.vmem [shape: f32[10], index: 1, kind: input, shape index: {}]
  %s2 = inlined_call_operand.vmem [shape: f32[8,2], index: 2, kind: output, shape index: {}]
  %s3 = sld [smem:[#allocation0]]
  $region22: #{tpu_custom_call.1} parent=0
    _
  %s5 = ssub.s32 1, %s3
  %s6 = scalar_select 0, %s5, %s3
  $region1: #{tpu_custom_call.1} parent=0
    #allocation2 [shape = 'u8[512]{0}', space=smem, size = 0x200, scoped, tag = 'input window, operand 1, single buffered']
    #allocation3 [shape = 's32[1]{0}', space=sflag, size = 0x4, scoped, tag = 'scoped memory for tpu_custom_call.1']
    %7 = vsyncpa [#allocation3], 0
    // Predicated region
    $region2: #{tpu_custom_call.1} parent=1 // pred_check
      _
    $region3: #{tpu_custom_call.1} parent=1 // pred_check_branch
      %9 = sbr.rel (0) target = $region5
    $region4: #{tpu_custom_call.1} parent=1 // pred_region
      _
    $region5: #{tpu_custom_call.1} parent=1 // pred_fallthru
      _
    // Predicated region
    $region6: #{tpu_custom_call.1} parent=1 // pred_check
      _
    $region7: #{tpu_custom_call.1} parent=1 // pred_check_branch
      %11 = sbr.rel (0) target = $region9
    $region8: #{tpu_custom_call.1} parent=1 // pred_region
      %s13 = ssub.s32 16, 16
      %14 = vsyncadd [#allocation3], %s13
      %s16 = sshll.u32 %s1, 4
      %s17 = int_to_ptr.vmem [resolvable:$true] %s16
      %19 = dma.vmem_to_smem %s17, 16, [#allocation2], [#allocation3]
    $region9: #{tpu_custom_call.1} parent=1 // pred_fallthru
      _
    // Predicated region
    $region10: #{tpu_custom_call.1} parent=1 // pred_check
      _
    $region11: #{tpu_custom_call.1} parent=1 // pred_check_branch
      %21 = sbr.rel (0) target = $region13
    $region12: #{tpu_custom_call.1} parent=1 // pred_region
      %22 = dma.done [#allocation3], 16
    $region13: #{tpu_custom_call.1} parent=1 // pred_fallthru
      _
    %23 = sfence
    %v24 = vld [vmem:[%s0] sm:$0xff]
    %s25 = sld [smem:[#allocation2]]
    %v26 = vstv %s25
    %v27 = vmul.f32 %v24, %v26
    %s28 = sld [smem:[#allocation2 + $0x2]]
    %v29 = vstv %s28
    %v30 = vmul.f32 %v24, %v29
    %32 = vrot.lane.b32.xlu0 %v30, 127
    %v33 = vpop.permute.xlu0 %32
    %v35 = vadd.f32 %v27, %v33
    %s36 = sld [smem:[#allocation2 + $0x4]]
    %v37 = vstv %s36
    %v38 = vmul.f32 %v24, %v37
    %40 = vrot.lane.b32.xlu0 %v38, 126
    %v41 = vpop.permute.xlu0 %40
    %v43 = vadd.f32 %v35, %v41
    %s44 = sld [smem:[#allocation2 + $0x6]]
    %v45 = vstv %s44
    %v46 = vmul.f32 %v24, %v45
    %48 = vrot.lane.b32.xlu0 %v46, 125
    %v49 = vpop.permute.xlu0 %48
    %v51 = vadd.f32 %v43, %v49
    %s52 = sld [smem:[#allocation2 + $0x8]]
    %v53 = vstv %s52
    %v54 = vadd.f32 %v51, %v53
    %s55 = sld [smem:[#allocation2 + $0x1]]
    %v56 = vstv %s55
    %v57 = vmul.f32 %v24, %v56
    %s58 = sld [smem:[#allocation2 + $0x3]]
    %v59 = vstv %s58
    %v60 = vmul.f32 %v24, %v59
    %62 = vrot.lane.b32.xlu0 %v60, 127
    %v63 = vpop.permute.xlu0 %62
    %v65 = vadd.f32 %v57, %v63
    %s66 = sld [smem:[#allocation2 + $0x5]]
    %v67 = vstv %s66
    %v68 = vmul.f32 %v24, %v67
    %70 = vrot.lane.b32.xlu0 %v68, 126
    %v71 = vpop.permute.xlu0 %70
    %v73 = vadd.f32 %v65, %v71
    %s74 = sld [smem:[#allocation2 + $0x7]]
    %v75 = vstv %s74
    %v76 = vmul.f32 %v24, %v75
    %78 = vrot.lane.b32.xlu0 %v76, 125
    %v79 = vpop.permute.xlu0 %78
    %v81 = vadd.f32 %v73, %v79
    %s82 = sld [smem:[#allocation2 + $0x9]]
    %v83 = vstv %s82
    %v84 = vadd.f32 %v81, %v83
    %v85 = vlaneseq
    %v86 = vand.u32 %v85, 127
    %88 = vset.pattern.permute.xlu0 0
    %89 = vperm.xlu0 %88, %v54
    %v90 = vpop.permute.xlu0 %89
    %vm92 = vcmp.eq.s32.totalorder %v86, 1
    %94 = vset.pattern.permute.xlu0 0
    %95 = vperm.xlu0 %94, %v84
    %v96 = vpop.permute.xlu0 %95
    %v98 = vsel %vm92, %v96, %v90
    %vm99 = vcmask 15360
    %100 = vst.msk [vmem:[%s2] sm:$0xff] %vm99, %v98
    // Predicated region
    $region14: #{tpu_custom_call.1} parent=1 // pred_check
      _
    $region15: #{tpu_custom_call.1} parent=1 // pred_check_branch
      %102 = sbr.rel (0) target = $region17
    $region16: #{tpu_custom_call.1} parent=1 // pred_region
      _
    $region17: #{tpu_custom_call.1} parent=1 // pred_fallthru
      _
    // Predicated region
    $region18: #{tpu_custom_call.1} parent=1 // pred_check
      _
    $region19: #{tpu_custom_call.1} parent=1 // pred_check_branch
      %104 = sbr.rel (0) target = $region21
    $region20: #{tpu_custom_call.1} parent=1 // pred_region
      _
    $region21: #{tpu_custom_call.1} parent=1 // pred_fallthru
      _
    %105 = vsyncpa [#allocation3], 1

</llo_original>
